<compile_context>
chip_gen: v7x
topology: tpu7x:2x2x1
jax: 0.10.0
libtpu: 0.0.40
codegen_flags: <defaults>
</compile_context>

<pallas_src>
import functools

import jax
import jax.numpy as jnp
from jax.experimental import pallas as pl
from jax.experimental.pallas import tpu as pltpu


_TARGET_BLOCK_ELEMS = 512 * 1024        # ~2 MiB of f32 compute per block
_VMEM_LIMIT_BYTES = 32 * 1024 * 1024    # safe on v5e/v6e (128 MiB) and v7x (64 MiB)


# --------------------------------------------------------------------------
# Tile planning
# --------------------------------------------------------------------------
def _round_down_to_multiple(v, m):
    return (v // m) * m


def _largest_dividing_multiple(dim, mult, cap):
    """Largest d with d % mult == 0, dim % d == 0, d <= cap; None if none exists."""
    d = _round_down_to_multiple(min(cap, dim), mult)
    while d >= mult:
        if dim % d == 0:
            return d
        d -= mult
    return None


def _plan_4d(M, HW, target_elems):
    """Plan for x viewed as (M=B*C, HW).  Returns (tm, hw_chunk, n_hw)."""
    if HW * 8 <= target_elems or HW <= 128:
        # Full spatial extent on lanes; budget-sized row (channel) tile.
        hw_chunk, n_hw = HW, 1
        tm = min(M, max(8, _round_down_to_multiple(target_elems // max(HW, 1), 8)))
    else:
        # Very large HW: split it onto a trailing reduction grid axis.
        hw_chunk = _largest_dividing_multiple(HW, 128, max(128, target_elems // 8))
        if hw_chunk is None:
            hw_chunk = HW            # fall back: one big block (vmem_limit covers it)
        n_hw = HW // hw_chunk
        tm = M if M < 8 else 8
    return tm, hw_chunk, n_hw


def _plan_3d(N, C, target_elems):
    """Plan for x of shape (B, N, C).  Returns (n_chunk, tc, n_k)."""
    if C * 8 <= target_elems or C <= 128:
        tc = C                                         # full channels on lanes
    else:
        tc = max(128, _round_down_to_multiple(target_elems // 8, 128))
    max_rows = max(8, target_elems // max(tc, 1))
    if N <= max_rows:
        n_chunk, n_k = N, 1
    else:
        n_chunk = _largest_dividing_multiple(N, 8, max_rows)
        if n_chunk is None:
            n_chunk, n_k = N, 1                        # fall back: full N block
        else:
            n_k = N // n_chunk
    return n_chunk, tc, n_k


# --------------------------------------------------------------------------
# Kernels
# --------------------------------------------------------------------------
def _make_kernel_4d(eps, inv_hw):
    """x block (tm, hw_chunk); reduce over lanes (HW); acc (tm, 1) f32."""
    def kernel(p_ref, x_ref, o_ref, acc_ref):
        k = pl.program_id(1)
        p = p_ref[0]

        @pl.when(k == 0)
        def _init():
            acc_ref[...] = jnp.zeros_like(acc_ref)

        xc = jnp.maximum(x_ref[...].astype(jnp.float32), eps)
        is_p3 = jnp.abs(p - 3.0) < 1e-6

        @pl.when(is_p3)                       # default GeM p=3: VPU-only (no EUP)
        def _cube():
            acc_ref[...] += jnp.sum(xc * xc * xc, axis=-1, keepdims=True)

        @pl.when(jnp.logical_not(is_p3))      # generic p: exp/log on the EUP
        def _powp():
            acc_ref[...] += jnp.sum(jnp.exp(p * jnp.log(xc)), axis=-1, keepdims=True)

        @pl.when(k == pl.num_programs(1) - 1)
        def _finalize():
            m = acc_ref[...] * inv_hw                          # mean over H*W
            o_ref[...] = jnp.exp(jnp.log(m) * (1.0 / p)).astype(o_ref.dtype)
    return kernel


def _make_kernel_3d(eps, inv_n):
    """x block (1, n_chunk, tc); reduce over sublanes (tokens); acc (1, tc) f32."""
    def kernel(p_ref, x_ref, o_ref, acc_ref):
        k = pl.program_id(2)
        p = p_ref[0]

        @pl.when(k == 0)
        def _init():
            acc_ref[...] = jnp.zeros_like(acc_ref)

        xc = jnp.maximum(x_ref[0].astype(jnp.float32), eps)    # (n_chunk, tc)
        is_p3 = jnp.abs(p - 3.0) < 1e-6

        @pl.when(is_p3)
        def _cube():
            acc_ref[...] += jnp.sum(xc * xc * xc, axis=0, keepdims=True)

        @pl.when(jnp.logical_not(is_p3))
        def _powp():
            acc_ref[...] += jnp.sum(jnp.exp(p * jnp.log(xc)), axis=0, keepdims=True)

        @pl.when(k == pl.num_programs(2) - 1)
        def _finalize():
            m = acc_ref[...] * inv_n                           # mean over N
            o_ref[0] = jnp.exp(jnp.log(m) * (1.0 / p)).astype(o_ref.dtype)
    return kernel


# --------------------------------------------------------------------------
# Wrapper
# --------------------------------------------------------------------------
@functools.partial(jax.jit, static_argnames=("eps", "block_elems"))
def gem_forward(x, p, eps=1e-6, block_elems=_TARGET_BLOCK_ELEMS):
    """GeM pooling.  x: (B, C, H, W) or (B, N, C); p: learnable scalar (() or (1,))."""
    p_arr = jnp.asarray(p, jnp.float32).reshape(1)
    smem_spec = pl.BlockSpec(memory_space=pltpu.MemorySpace.SMEM)

    if x.ndim == 4:
        B, C, H, W = x.shape
        M, HW = B * C, H * W
        x2 = x.reshape(M, HW)                         # free reshape, natural layout
        tm, hw_chunk, n_hw = _plan_4d(M, HW, block_elems)
        out = pl.pallas_call(
            _make_kernel_4d(eps, 1.0 / HW),
            out_shape=jax.ShapeDtypeStruct((M, 1), x.dtype),
            grid_spec=pltpu.PrefetchScalarGridSpec(
                num_scalar_prefetch=0,
                grid=(pl.cdiv(M, tm), n_hw),
                in_specs=[
                    smem_spec,                                            # p
                    pl.BlockSpec((tm, hw_chunk), lambda i, k: (i, k)),    # x
                ],
                out_specs=pl.BlockSpec((tm, 1), lambda i, k: (i, 0)),
                scratch_shapes=[pltpu.VMEM((tm, 1), jnp.float32)],
            ),
            compiler_params=pltpu.CompilerParams(
                dimension_semantics=("parallel", "arbitrary"),
                vmem_limit_bytes=_VMEM_LIMIT_BYTES),
        )(p_arr, x2)
        return out.reshape(B, C)

    elif x.ndim == 3:
        B, N, C = x.shape
        n_chunk, tc, n_k = _plan_3d(N, C, block_elems)
        out = pl.pallas_call(
            _make_kernel_3d(eps, 1.0 / N),
            out_shape=jax.ShapeDtypeStruct((B, 1, C), x.dtype),
            grid_spec=pltpu.PrefetchScalarGridSpec(
                num_scalar_prefetch=0,
                grid=(B, pl.cdiv(C, tc), n_k),
                in_specs=[
                    smem_spec,                                                  # p
                    pl.BlockSpec((1, n_chunk, tc), lambda b, c, k: (b, k, c)),  # x
                ],
                out_specs=pl.BlockSpec((1, 1, tc), lambda b, c, k: (b, 0, c)),
                scratch_shapes=[pltpu.VMEM((1, tc), jnp.float32)],
            ),
            compiler_params=pltpu.CompilerParams(
                dimension_semantics=("parallel", "parallel", "arbitrary"),
                vmem_limit_bytes=_VMEM_LIMIT_BYTES),
        )(p_arr, x)
        return out.reshape(B, C)

    else:
        raise ValueError("Unsupported input shape for GeM")


def gem_reference(x, p, eps=1e-6):
    """Pure-JAX reference mirroring the PyTorch forward."""
    p = jnp.asarray(p, jnp.float32).reshape(())
    xc = jnp.maximum(x.astype(jnp.float32), eps)      # == clamp(min=eps)
    if x.ndim == 4:
        y = jnp.power(xc, p).mean(axis=(2, 3))
    elif x.ndim == 3:
        y = jnp.power(xc, p).mean(axis=1)
    else:
        raise ValueError("Unsupported input shape for GeM")
    return jnp.power(y, 1.0 / p).astype(x.dtype)


if __name__ == "__main__":
    key = jax.random.PRNGKey(0)
    k1, k2, k3, k4 = jax.random.split(key, 4)
    eps = 1e-6

    p3 = jnp.ones((1,), jnp.float32) * 3.0       # default GeM p (VPU fast path)
    p25 = jnp.ones((1,), jnp.float32) * 2.5      # generic p (EUP exp/log path)

    # --- 4-D path (B, C, H, W), p = 3, single-chunk tiling ---
    x4 = jax.random.normal(k1, (2, 64, 16, 16), jnp.float32)
    out4 = jax.block_until_ready(gem_forward(x4, p3, eps=eps))
    ref4 = gem_reference(x4, p3, eps=eps)
    assert out4.shape == (2, 64)
    assert jnp.allclose(out4, ref4, atol=1e-4, rtol=1e-4), "4D p=3 mismatch"

    # --- 3-D path (B, N, C), generic p ---
    x3 = jax.random.normal(k2, (2, 8, 256), jnp.float32)
    out3 = jax.block_until_ready(gem_forward(x3, p25, eps=eps))
    ref3 = gem_reference(x3, p25, eps=eps)
    assert out3.shape == (2, 256)
    assert jnp.allclose(out3, ref3, atol=1e-4, rtol=1e-4), "3D p=2.5 mismatch"

    # --- 4-D bf16, HW-chunked accumulator path (forced via tiny block budget) ---
    x4b = jax.random.normal(k3, (2, 16, 16, 32), jnp.float32).astype(jnp.bfloat16)
    out4b = jax.block_until_ready(gem_forward(x4b, p3, eps=eps, block_elems=2048))
    ref4b = gem_reference(x4b, p3, eps=eps)
    assert jnp.allclose(out4b.astype(jnp.float32), ref4b.astype(jnp.float32),
                        atol=2e-2, rtol=2e-2), "4D bf16 chunked mismatch"

    # --- 3-D, N-chunked accumulator path (forced via tiny block budget) ---
    x3b = jax.random.normal(k4, (2, 64, 128), jnp.float32)
    out3b = jax.block_until_ready(gem_forward(x3b, p3, eps=eps, block_elems=2048))
    ref3b = gem_reference(x3b, p3, eps=eps)
    assert jnp.allclose(out3b, ref3b, atol=1e-4, rtol=1e-4), "3D chunked mismatch"

    print("KERNEL_OK")
</pallas_src>

<mosaic_0001>
module attributes {stable_mosaic.version = 11 : i64} {
  func.func @kernel(%arg0: i32, %arg1: i32, %arg2: memref<1xf32, #tpu.memory_space<smem>>, %arg3: memref<128x256xf32, #tpu.memory_space<vmem>>, %arg4: memref<128x1xf32, #tpu.memory_space<vmem>>, %arg5: memref<128x1xf32, #tpu.memory_space<vmem>>) attributes {dimension_semantics = [#tpu.dimension_semantics<parallel>, #tpu.dimension_semantics<arbitrary>], iteration_bounds = array<i64: 1, 1>, scalar_prefetch = 0 : i64, scratch_operands = 1 : i64, tpu.core_type = #tpu.core_type<tc>, window_params = [{transform_indices = @transform_0, window_bounds = array<i64: 1>}, {transform_indices = @transform_1, window_bounds = array<i64: 128, 256>}, {transform_indices = @transform_2, window_bounds = array<i64: 128, 1>}]} {
    %c0 = arith.constant 0 : index
    %0 = memref.load %arg2[%c0] : memref<1xf32, #tpu.memory_space<smem>>
    %c0_i32 = arith.constant 0 : i32
    %1 = arith.cmpi eq, %arg1, %c0_i32 : i32
    %2 = arith.extui %1 : i1 to i32
    %c0_i32_0 = arith.constant 0 : i32
    %3 = arith.cmpi ne, %2, %c0_i32_0 : i32
    scf.if %3 {
      %cst_9 = arith.constant 0.000000e+00 : f32
      %18 = vector.broadcast %cst_9 : f32 to vector<128x1xf32>
      %c0_10 = arith.constant 0 : index
      %c0_11 = arith.constant 0 : index
      %19 = vector.load %arg5[%c0_10, %c0_11] : memref<128x1xf32, #tpu.memory_space<vmem>>, vector<128x1xf32>
      tpu.vector_store %arg5[%c0_10, %c0_11], %18 {strides = array<i32>} : memref<128x1xf32, #tpu.memory_space<vmem>>, vector<128x1xf32>,
    } else {
    }
    %c0_1 = arith.constant 0 : index
    %c0_2 = arith.constant 0 : index
    %4 = vector.load %arg3[%c0_1, %c0_2] : memref<128x256xf32, #tpu.memory_space<vmem>>, vector<128x256xf32>
    %cst = arith.constant 9.99999997E-7 : f32
    %5 = vector.broadcast %cst : f32 to vector<128x256xf32>
    %6 = arith.maximumf %4, %5 : vector<128x256xf32>
    %cst_3 = arith.constant 3.000000e+00 : f32
    %7 = arith.subf %0, %cst_3 : f32
    %8 = math.absf %7 : f32
    %cst_4 = arith.constant 9.99999997E-7 : f32
    %9 = arith.cmpf olt, %8, %cst_4 : f32
    %10 = arith.extui %9 : i1 to i32
    %c0_i32_5 = arith.constant 0 : i32
    %11 = arith.cmpi ne, %10, %c0_i32_5 : i32
    scf.if %11 {
      %c0_9 = arith.constant 0 : index
      %c0_10 = arith.constant 0 : index
      %18 = vector.load %arg5[%c0_9, %c0_10] : memref<128x1xf32, #tpu.memory_space<vmem>>, vector<128x1xf32>
      %19 = arith.mulf %6, %6 : vector<128x256xf32>
      %20 = arith.mulf %19, %6 : vector<128x256xf32>
      %cst_11 = arith.constant dense<0.000000e+00> : vector<128xf32>
      %21 = vector.multi_reduction <add>, %20, %cst_11 [1] : vector<128x256xf32> to vector<128xf32>
      %22 = vector.shape_cast %21 : vector<128xf32> to vector<128x1xf32>
      %23 = arith.addf %18, %22 : vector<128x1xf32>
      %c0_12 = arith.constant 0 : index
      %c0_13 = arith.constant 0 : index
      %24 = vector.load %arg5[%c0_12, %c0_13] : memref<128x1xf32, #tpu.memory_space<vmem>>, vector<128x1xf32>
      tpu.vector_store %arg5[%c0_12, %c0_13], %23 {strides = array<i32>} : memref<128x1xf32, #tpu.memory_space<vmem>>, vector<128x1xf32>,
    } else {
    }
    %true = arith.constant true
    %12 = arith.xori %9, %true : i1
    %13 = arith.extui %12 : i1 to i32
    %c0_i32_6 = arith.constant 0 : i32
    %14 = arith.cmpi ne, %13, %c0_i32_6 : i32
    scf.if %14 {
      %c0_9 = arith.constant 0 : index
      %c0_10 = arith.constant 0 : index
      %18 = vector.load %arg5[%c0_9, %c0_10] : memref<128x1xf32, #tpu.memory_space<vmem>>, vector<128x1xf32>
      %19 = math.log %6 : vector<128x256xf32>
      %20 = vector.broadcast %0 : f32 to vector<128x256xf32>
      %21 = arith.mulf %20, %19 : vector<128x256xf32>
      %22 = math.exp %21 : vector<128x256xf32>
      %cst_11 = arith.constant dense<0.000000e+00> : vector<128xf32>
      %23 = vector.multi_reduction <add>, %22, %cst_11 [1] : vector<128x256xf32> to vector<128xf32>
      %24 = vector.shape_cast %23 : vector<128xf32> to vector<128x1xf32>
      %25 = arith.addf %18, %24 : vector<128x1xf32>
      %c0_12 = arith.constant 0 : index
      %c0_13 = arith.constant 0 : index
      %26 = vector.load %arg5[%c0_12, %c0_13] : memref<128x1xf32, #tpu.memory_space<vmem>>, vector<128x1xf32>
      tpu.vector_store %arg5[%c0_12, %c0_13], %25 {strides = array<i32>} : memref<128x1xf32, #tpu.memory_space<vmem>>, vector<128x1xf32>,
    } else {
    }
    %c0_i32_7 = arith.constant 0 : i32
    %15 = arith.cmpi eq, %arg1, %c0_i32_7 : i32
    %16 = arith.extui %15 : i1 to i32
    %c0_i32_8 = arith.constant 0 : i32
    %17 = arith.cmpi ne, %16, %c0_i32_8 : i32
    scf.if %17 {
      %c0_9 = arith.constant 0 : index
      %c0_10 = arith.constant 0 : index
      %18 = vector.load %arg5[%c0_9, %c0_10] : memref<128x1xf32, #tpu.memory_space<vmem>>, vector<128x1xf32>
      %cst_11 = arith.constant 3.906250e-03 : f32
      %19 = vector.broadcast %cst_11 : f32 to vector<128x1xf32>
      %20 = arith.mulf %18, %19 : vector<128x1xf32>
      %21 = math.log %20 : vector<128x1xf32>
      %cst_12 = arith.constant 1.000000e+00 : f32
      %22 = arith.divf %cst_12, %0 : f32
      %23 = vector.broadcast %22 : f32 to vector<128x1xf32>
      %24 = arith.mulf %21, %23 : vector<128x1xf32>
      %25 = math.exp %24 : vector<128x1xf32>
      %c0_13 = arith.constant 0 : index
      %c0_14 = arith.constant 0 : index
      %26 = vector.load %arg4[%c0_13, %c0_14] : memref<128x1xf32, #tpu.memory_space<vmem>>, vector<128x1xf32>
      tpu.vector_store %arg4[%c0_13, %c0_14], %25 {strides = array<i32>} : memref<128x1xf32, #tpu.memory_space<vmem>>, vector<128x1xf32>,
    } else {
    }
    return
  }
  func.func @transform_0(%arg0: i32, %arg1: i32) -> i32 {
    %c0_i32 = arith.constant 0 : i32
    %c0_i32_0 = arith.constant 0 : i32
    return %c0_i32 : i32
  }
  func.func @transform_1(%arg0: i32, %arg1: i32) -> (i32, i32) {
    %c0_i32 = arith.constant 0 : i32
    return %arg0, %arg1 : i32, i32
  }
  func.func @transform_2(%arg0: i32, %arg1: i32) -> (i32, i32) {
    %c0_i32 = arith.constant 0 : i32
    %c0_i32_0 = arith.constant 0 : i32
    return %arg0, %c0_i32 : i32, i32
  }
}

</mosaic_0001>

<llo_original>
// kernel: gem_forward.1
$region0: #{gem_forward.1}
  #allocation0 [shape = 'u32[]', space=smem, size = 0x4, offset = 0x4, fixed_abs, tag = 'smem constant byte address 0x4 - core index']
  #allocation1 [shape = 'u32[144,128]{1,0:T(1,128)}', space=vmem, size = 0x12000, scoped, tag = 'internal scratch']
  #allocation2 [shape = 'f32[128,1]{1,0:T(8,128)}', space=vmem, size = 0x10000, scoped, tag = 'scratch operand']
  #allocation3 [shape = 'f32[1]{0:T(128)S(6)}', space=smem, size = 0x200, scoped, tag = 'scoped memory for gem_forward.1']
  %s0 = inlined_call_operand.<no memory space> [shape: f32[1], index: 0, kind: input, shape index: {}]
  %s1 = inlined_call_operand.vmem [shape: f32[128,256], index: 1, kind: input, shape index: {}]
  %s2 = inlined_call_operand.vmem [shape: f32[128,1], index: 2, kind: output, shape index: {}]
  %s3 = sld [smem:[#allocation0]]
  $region34: #{gem_forward.1} parent=0
    _
  %s5 = ssub.s32 1, %s3
  %s6 = scalar_select 0, %s5, %s3
  %7 = sst [smem:[#allocation3]] %s0
  // Predicated region
  $region2: #{gem_forward.1} parent=0 // pred_check
    _
  $region3: #{gem_forward.1} parent=0 // pred_check_branch
    %9 = sbr.rel (0) target = $region5
  $region4: #{gem_forward.1} parent=0 // pred_region
    _
  $region5: #{gem_forward.1} parent=0 // pred_fallthru
    _
  // Predicated region
  $region6: #{gem_forward.1} parent=0 // pred_check
    _
  $region7: #{gem_forward.1} parent=0 // pred_check_branch
    %11 = sbr.rel (0) target = $region9
  $region8: #{gem_forward.1} parent=0 // pred_region
    _
  $region9: #{gem_forward.1} parent=0 // pred_fallthru
    _
  %s12 = sld [smem:[#allocation3]]
  %p13 = scmp.eq.s32.totalorder 0, 0
  // Predicated region
  $region10: #{gem_forward.1} parent=0 // pred_check
    %p14 = pneg %p13
  $region11: #{gem_forward.1} parent=0 // pred_check_branch
    %16 = sbr.rel (%p14) target = $region13
  $region12: #{gem_forward.1} parent=0 // pred_region
    %vm17 = vcmask 7168
    %18 = vst.msk [vmem:[#allocation2] sm:$0xff] %vm17, 0.0
    %19 = vst.msk [vmem:[#allocation2 + $0x8] sm:$0xff] %vm17, 0.0
    %20 = vst.msk [vmem:[#allocation2 + $0x10] sm:$0xff] %vm17, 0.0
    %21 = vst.msk [vmem:[#allocation2 + $0x18] sm:$0xff] %vm17, 0.0
    %22 = vst.msk [vmem:[#allocation2 + $0x20] sm:$0xff] %vm17, 0.0
    %23 = vst.msk [vmem:[#allocation2 + $0x28] sm:$0xff] %vm17, 0.0
    %24 = vst.msk [vmem:[#allocation2 + $0x30] sm:$0xff] %vm17, 0.0
    %25 = vst.msk [vmem:[#allocation2 + $0x38] sm:$0xff] %vm17, 0.0
    %26 = vst.msk [vmem:[#allocation2 + $0x40] sm:$0xff] %vm17, 0.0
    %27 = vst.msk [vmem:[#allocation2 + $0x48] sm:$0xff] %vm17, 0.0
    %28 = vst.msk [vmem:[#allocation2 + $0x50] sm:$0xff] %vm17, 0.0
    %29 = vst.msk [vmem:[#allocation2 + $0x58] sm:$0xff] %vm17, 0.0
    %30 = vst.msk [vmem:[#allocation2 + $0x60] sm:$0xff] %vm17, 0.0
    %31 = vst.msk [vmem:[#allocation2 + $0x68] sm:$0xff] %vm17, 0.0
    %32 = vst.msk [vmem:[#allocation2 + $0x70] sm:$0xff] %vm17, 0.0
    %33 = vst.msk [vmem:[#allocation2 + $0x78] sm:$0xff] %vm17, 0.0
  $region13: #{gem_forward.1} parent=0 // pred_fallthru
    _
  %v34 = vld [vmem:[%s1] sm:$0xff]
  %v35 = vld [vmem:[%s1 + $0x8] sm:$0xff]
  %v36 = vld [vmem:[%s1 + $0x10] sm:$0xff]
  %v37 = vld [vmem:[%s1 + $0x18] sm:$0xff]
  %v38 = vld [vmem:[%s1 + $0x20] sm:$0xff]
  %v39 = vld [vmem:[%s1 + $0x28] sm:$0xff]
  %v40 = vld [vmem:[%s1 + $0x30] sm:$0xff]
  %v41 = vld [vmem:[%s1 + $0x38] sm:$0xff]
  %v42 = vld [vmem:[%s1 + $0x40] sm:$0xff]
  %v43 = vld [vmem:[%s1 + $0x48] sm:$0xff]
  %v44 = vld [vmem:[%s1 + $0x50] sm:$0xff]
  %v45 = vld [vmem:[%s1 + $0x58] sm:$0xff]
  %v46 = vld [vmem:[%s1 + $0x60] sm:$0xff]
  %v47 = vld [vmem:[%s1 + $0x68] sm:$0xff]
  %v48 = vld [vmem:[%s1 + $0x70] sm:$0xff]
  %v49 = vld [vmem:[%s1 + $0x78] sm:$0xff]
  %v50 = vld [vmem:[%s1 + $0x80] sm:$0xff]
  %v51 = vld [vmem:[%s1 + $0x88] sm:$0xff]
  %v52 = vld [vmem:[%s1 + $0x90] sm:$0xff]
  %v53 = vld [vmem:[%s1 + $0x98] sm:$0xff]
  %v54 = vld [vmem:[%s1 + $0xa0] sm:$0xff]
  %v55 = vld [vmem:[%s1 + $0xa8] sm:$0xff]
  %v56 = vld [vmem:[%s1 + $0xb0] sm:$0xff]
  %v57 = vld [vmem:[%s1 + $0xb8] sm:$0xff]
  %v58 = vld [vmem:[%s1 + $0xc0] sm:$0xff]
  %v59 = vld [vmem:[%s1 + $0xc8] sm:$0xff]
  %v60 = vld [vmem:[%s1 + $0xd0] sm:$0xff]
  %v61 = vld [vmem:[%s1 + $0xd8] sm:$0xff]
  %v62 = vld [vmem:[%s1 + $0xe0] sm:$0xff]
  %v63 = vld [vmem:[%s1 + $0xe8] sm:$0xff]
  %v64 = vld [vmem:[%s1 + $0xf0] sm:$0xff]
  %v65 = vld [vmem:[%s1 + $0xf8] sm:$0xff]
  %v66 = vmax.f32 %v34, 1e-06
  %v67 = vmax.f32 %v35, 1e-06
  %v68 = vmax.f32 %v36, 1e-06
  %v69 = vmax.f32 %v37, 1e-06
  %v70 = vmax.f32 %v38, 1e-06
  %v71 = vmax.f32 %v39, 1e-06
  %v72 = vmax.f32 %v40, 1e-06
  %v73 = vmax.f32 %v41, 1e-06
  %v74 = vmax.f32 %v42, 1e-06
  %v75 = vmax.f32 %v43, 1e-06
  %v76 = vmax.f32 %v44, 1e-06
  %v77 = vmax.f32 %v45, 1e-06
  %v78 = vmax.f32 %v46, 1e-06
  %v79 = vmax.f32 %v47, 1e-06
  %v80 = vmax.f32 %v48, 1e-06
  %v81 = vmax.f32 %v49, 1e-06
  %v82 = vmax.f32 %v50, 1e-06
  %v83 = vmax.f32 %v51, 1e-06
  %v84 = vmax.f32 %v52, 1e-06
  %v85 = vmax.f32 %v53, 1e-06
  %v86 = vmax.f32 %v54, 1e-06
  %v87 = vmax.f32 %v55, 1e-06
  %v88 = vmax.f32 %v56, 1e-06
  %v89 = vmax.f32 %v57, 1e-06
  %v90 = vmax.f32 %v58, 1e-06
  %v91 = vmax.f32 %v59, 1e-06
  %v92 = vmax.f32 %v60, 1e-06
  %v93 = vmax.f32 %v61, 1e-06
  %v94 = vmax.f32 %v62, 1e-06
  %v95 = vmax.f32 %v63, 1e-06
  %v96 = vmax.f32 %v64, 1e-06
  %v97 = vmax.f32 %v65, 1e-06
  %s98 = ssub.f32 %s12, 3.0
  %s99 = sand.u32 2147483647, %s98
  %p100 = scmp.lt.f32.partialorder %s99, 1e-06
  // Predicated region
  $region14: #{gem_forward.1} parent=0 // pred_check
    %p101 = pneg %p100
  $region15: #{gem_forward.1} parent=0 // pred_check_branch
    %103 = sbr.rel (%p101) target = $region17
  $region16: #{gem_forward.1} parent=0 // pred_region
    %v104 = vld [vmem:[#allocation2] sm:$0xff]
    %v105 = vld [vmem:[#allocation2 + $0x8] sm:$0xff]
    %v106 = vld [vmem:[#allocation2 + $0x10] sm:$0xff]
    %v107 = vld [vmem:[#allocation2 + $0x18] sm:$0xff]
    %v108 = vld [vmem:[#allocation2 + $0x20] sm:$0xff]
    %v109 = vld [vmem:[#allocation2 + $0x28] sm:$0xff]
    %v110 = vld [vmem:[#allocation2 + $0x30] sm:$0xff]
    %v111 = vld [vmem:[#allocation2 + $0x38] sm:$0xff]
    %v112 = vld [vmem:[#allocation2 + $0x40] sm:$0xff]
    %v113 = vld [vmem:[#allocation2 + $0x48] sm:$0xff]
    %v114 = vld [vmem:[#allocation2 + $0x50] sm:$0xff]
    %v115 = vld [vmem:[#allocation2 + $0x58] sm:$0xff]
    %v116 = vld [vmem:[#allocation2 + $0x60] sm:$0xff]
    %v117 = vld [vmem:[#allocation2 + $0x68] sm:$0xff]
    %v118 = vld [vmem:[#allocation2 + $0x70] sm:$0xff]
    %v119 = vld [vmem:[#allocation2 + $0x78] sm:$0xff]
    %v120 = vmul.f32 %v66, %v66
    %v121 = vmul.f32 %v67, %v67
    %v122 = vmul.f32 %v68, %v68
    %v123 = vmul.f32 %v69, %v69
    %v124 = vmul.f32 %v70, %v70
    %v125 = vmul.f32 %v71, %v71
    %v126 = vmul.f32 %v72, %v72
    %v127 = vmul.f32 %v73, %v73
    %v128 = vmul.f32 %v74, %v74
    %v129 = vmul.f32 %v75, %v75
    %v130 = vmul.f32 %v76, %v76
    %v131 = vmul.f32 %v77, %v77
    %v132 = vmul.f32 %v78, %v78
    %v133 = vmul.f32 %v79, %v79
    %v134 = vmul.f32 %v80, %v80
    %v135 = vmul.f32 %v81, %v81
    %v136 = vmul.f32 %v82, %v82
    %v137 = vmul.f32 %v83, %v83
    %v138 = vmul.f32 %v84, %v84
    %v139 = vmul.f32 %v85, %v85
    %v140 = vmul.f32 %v86, %v86
    %v141 = vmul.f32 %v87, %v87
    %v142 = vmul.f32 %v88, %v88
    %v143 = vmul.f32 %v89, %v89
    %v144 = vmul.f32 %v90, %v90
    %v145 = vmul.f32 %v91, %v91
    %v146 = vmul.f32 %v92, %v92
    %v147 = vmul.f32 %v93, %v93
    %v148 = vmul.f32 %v94, %v94
    %v149 = vmul.f32 %v95, %v95
    %v150 = vmul.f32 %v96, %v96
    %v151 = vmul.f32 %v97, %v97
    %v152 = vmul.f32 %v120, %v66
    %v153 = vmul.f32 %v121, %v67
    %v154 = vmul.f32 %v122, %v68
    %v155 = vmul.f32 %v123, %v69
    %v156 = vmul.f32 %v124, %v70
    %v157 = vmul.f32 %v125, %v71
    %v158 = vmul.f32 %v126, %v72
    %v159 = vmul.f32 %v127, %v73
    %v160 = vmul.f32 %v128, %v74
    %v161 = vmul.f32 %v129, %v75
    %v162 = vmul.f32 %v130, %v76
    %v163 = vmul.f32 %v131, %v77
    %v164 = vmul.f32 %v132, %v78
    %v165 = vmul.f32 %v133, %v79
    %v166 = vmul.f32 %v134, %v80
    %v167 = vmul.f32 %v135, %v81
    %v168 = vmul.f32 %v136, %v82
    %v169 = vmul.f32 %v137, %v83
    %v170 = vmul.f32 %v138, %v84
    %v171 = vmul.f32 %v139, %v85
    %v172 = vmul.f32 %v140, %v86
    %v173 = vmul.f32 %v141, %v87
    %v174 = vmul.f32 %v142, %v88
    %v175 = vmul.f32 %v143, %v89
    %v176 = vmul.f32 %v144, %v90
    %v177 = vmul.f32 %v145, %v91
    %v178 = vmul.f32 %v146, %v92
    %v179 = vmul.f32 %v147, %v93
    %v180 = vmul.f32 %v148, %v94
    %v181 = vmul.f32 %v149, %v95
    %v182 = vmul.f32 %v150, %v96
    %v183 = vmul.f32 %v151, %v97
    %v184 = vadd.f32 %v152, %v153
    %185 = vadd.xlane.f32.xlu0 %v184
    %v186 = vpop.xlane.xlu0 %185
    %v187 = vadd.f32 %v154, %v155
    %188 = vadd.xlane.f32.xlu0 %v187
    %v189 = vpop.xlane.xlu0 %188
    %v190 = vadd.f32 %v156, %v157
    %191 = vadd.xlane.f32.xlu0 %v190
    %v192 = vpop.xlane.xlu0 %191
    %v193 = vadd.f32 %v158, %v159
    %194 = vadd.xlane.f32.xlu0 %v193
    %v195 = vpop.xlane.xlu0 %194
    %v196 = vadd.f32 %v160, %v161
    %197 = vadd.xlane.f32.xlu0 %v196
    %v198 = vpop.xlane.xlu0 %197
    %v199 = vadd.f32 %v162, %v163
    %200 = vadd.xlane.f32.xlu0 %v199
    %v201 = vpop.xlane.xlu0 %200
    %v202 = vadd.f32 %v164, %v165
    %203 = vadd.xlane.f32.xlu0 %v202
    %v204 = vpop.xlane.xlu0 %203
    %v205 = vadd.f32 %v166, %v167
    %206 = vadd.xlane.f32.xlu0 %v205
    %v207 = vpop.xlane.xlu0 %206
    %v208 = vadd.f32 %v168, %v169
    %209 = vadd.xlane.f32.xlu0 %v208
    %v210 = vpop.xlane.xlu0 %209
    %v211 = vadd.f32 %v170, %v171
    %212 = vadd.xlane.f32.xlu0 %v211
    %v213 = vpop.xlane.xlu0 %212
    %v214 = vadd.f32 %v172, %v173
    %215 = vadd.xlane.f32.xlu0 %v214
    %v216 = vpop.xlane.xlu0 %215
    %v217 = vadd.f32 %v174, %v175
    %218 = vadd.xlane.f32.xlu0 %v217
    %v219 = vpop.xlane.xlu0 %218
    %v220 = vadd.f32 %v176, %v177
    %221 = vadd.xlane.f32.xlu0 %v220
    %v222 = vpop.xlane.xlu0 %221
    %v223 = vadd.f32 %v178, %v179
    %224 = vadd.xlane.f32.xlu0 %v223
    %v225 = vpop.xlane.xlu0 %224
    %v226 = vadd.f32 %v180, %v181
    %227 = vadd.xlane.f32.xlu0 %v226
    %v228 = vpop.xlane.xlu0 %227
    %v229 = vadd.f32 %v182, %v183
    %230 = vadd.xlane.f32.xlu0 %v229
    %v231 = vpop.xlane.xlu0 %230
    %v232 = vadd.f32 %v104, %v186
    %v233 = vadd.f32 %v105, %v189
    %v234 = vadd.f32 %v106, %v192
    %v235 = vadd.f32 %v107, %v195
    %v236 = vadd.f32 %v108, %v198
    %v237 = vadd.f32 %v109, %v201
    %v238 = vadd.f32 %v110, %v204
    %v239 = vadd.f32 %v111, %v207
    %v240 = vadd.f32 %v112, %v210
    %v241 = vadd.f32 %v113, %v213
    %v242 = vadd.f32 %v114, %v216
    %v243 = vadd.f32 %v115, %v219
    %v244 = vadd.f32 %v116, %v222
    %v245 = vadd.f32 %v117, %v225
    %v246 = vadd.f32 %v118, %v228
    %v247 = vadd.f32 %v119, %v231
    %vm248 = vcmask 7168
    %249 = vst.msk [vmem:[#allocation2] sm:$0xff] %vm248, %v232
    %250 = vst.msk [vmem:[#allocation2 + $0x8] sm:$0xff] %vm248, %v233
    %251 = vst.msk [vmem:[#allocation2 + $0x10] sm:$0xff] %vm248, %v234
    %252 = vst.msk [vmem:[#allocation2 + $0x18] sm:$0xff] %vm248, %v235
    %253 = vst.msk [vmem:[#allocation2 + $0x20] sm:$0xff] %vm248, %v236
    %254 = vst.msk [vmem:[#allocation2 + $0x28] sm:$0xff] %vm248, %v237
    %255 = vst.msk [vmem:[#allocation2 + $0x30] sm:$0xff] %vm248, %v238
    %256 = vst.msk [vmem:[#allocation2 + $0x38] sm:$0xff] %vm248, %v239
    %257 = vst.msk [vmem:[#allocation2 + $0x40] sm:$0xff] %vm248, %v240
    %258 = vst.msk [vmem:[#allocation2 + $0x48] sm:$0xff] %vm248, %v241
    %259 = vst.msk [vmem:[#allocation2 + $0x50] sm:$0xff] %vm248, %v242
    %260 = vst.msk [vmem:[#allocation2 + $0x58] sm:$0xff] %vm248, %v243
    %261 = vst.msk [vmem:[#allocation2 + $0x60] sm:$0xff] %vm248, %v244
    %262 = vst.msk [vmem:[#allocation2 + $0x68] sm:$0xff] %vm248, %v245
    %263 = vst.msk [vmem:[#allocation2 + $0x70] sm:$0xff] %vm248, %v246
    %264 = vst.msk [vmem:[#allocation2 + $0x78] sm:$0xff] %vm248, %v247
  $region17: #{gem_forward.1} parent=0 // pred_fallthru
    _
  %p265 = pneg %p100
  // Predicated region
  $region18: #{gem_forward.1} parent=0 // pred_check
    _
  $region19: #{gem_forward.1} parent=0 // pred_check_branch
    %267 = sbr.rel (%p100) target = $region21
  $region20: #{gem_forward.1} parent=0 // pred_region
    %v268 = vld [vmem:[#allocation2] sm:$0xff]
    %v269 = vld [vmem:[#allocation2 + $0x8] sm:$0xff]
    %v270 = vld [vmem:[#allocation2 + $0x10] sm:$0xff]
    %v271 = vld [vmem:[#allocation2 + $0x18] sm:$0xff]
    %v272 = vld [vmem:[#allocation2 + $0x20] sm:$0xff]
    %v273 = vld [vmem:[#allocation2 + $0x28] sm:$0xff]
    %v274 = vld [vmem:[#allocation2 + $0x30] sm:$0xff]
    %v275 = vld [vmem:[#allocation2 + $0x38] sm:$0xff]
    %v276 = vld [vmem:[#allocation2 + $0x40] sm:$0xff]
    %v277 = vld [vmem:[#allocation2 + $0x48] sm:$0xff]
    %v278 = vld [vmem:[#allocation2 + $0x50] sm:$0xff]
    %v279 = vld [vmem:[#allocation2 + $0x58] sm:$0xff]
    %v280 = vld [vmem:[#allocation2 + $0x60] sm:$0xff]
    %v281 = vld [vmem:[#allocation2 + $0x68] sm:$0xff]
    %v282 = vld [vmem:[#allocation2 + $0x70] sm:$0xff]
    %v283 = vld [vmem:[#allocation2 + $0x78] sm:$0xff]
    %v284 = vlog2.pop %v66
    %v285 = vmul.f32 %v284, 0.6931472
    %v286 = vlog2.pop %v67
    %v287 = vmul.f32 %v286, 0.6931472
    %v288 = vlog2.pop %v68
    %v289 = vmul.f32 %v288, 0.6931472
    %v290 = vlog2.pop %v69
    %v291 = vmul.f32 %v290, 0.6931472
    %v292 = vlog2.pop %v70
    %v293 = vmul.f32 %v292, 0.6931472
    %v294 = vlog2.pop %v71
    %v295 = vmul.f32 %v294, 0.6931472
    %v296 = vlog2.pop %v72
    %v297 = vmul.f32 %v296, 0.6931472
    %v298 = vlog2.pop %v73
    %v299 = vmul.f32 %v298, 0.6931472
    %v300 = vlog2.pop %v74
    %v301 = vmul.f32 %v300, 0.6931472
    %v302 = vlog2.pop %v75
    %v303 = vmul.f32 %v302, 0.6931472
    %v304 = vlog2.pop %v76
    %v305 = vmul.f32 %v304, 0.6931472
    %v306 = vlog2.pop %v77
    %v307 = vmul.f32 %v306, 0.6931472
    %v308 = vlog2.pop %v78
    %v309 = vmul.f32 %v308, 0.6931472
    %v310 = vlog2.pop %v79
    %v311 = vmul.f32 %v310, 0.6931472
    %v312 = vlog2.pop %v80
    %v313 = vmul.f32 %v312, 0.6931472
    %v314 = vlog2.pop %v81
    %v315 = vmul.f32 %v314, 0.6931472
    %v316 = vlog2.pop %v82
    %v317 = vmul.f32 %v316, 0.6931472
    %v318 = vlog2.pop %v83
    %v319 = vmul.f32 %v318, 0.6931472
    %v320 = vlog2.pop %v84
    %v321 = vmul.f32 %v320, 0.6931472
    %v322 = vlog2.pop %v85
    %v323 = vmul.f32 %v322, 0.6931472
    %v324 = vlog2.pop %v86
    %v325 = vmul.f32 %v324, 0.6931472
    %v326 = vlog2.pop %v87
    %v327 = vmul.f32 %v326, 0.6931472
    %v328 = vlog2.pop %v88
    %v329 = vmul.f32 %v328, 0.6931472
    %v330 = vlog2.pop %v89
    %v331 = vmul.f32 %v330, 0.6931472
    %v332 = vlog2.pop %v90
    %v333 = vmul.f32 %v332, 0.6931472
    %v334 = vlog2.pop %v91
    %v335 = vmul.f32 %v334, 0.6931472
    %v336 = vlog2.pop %v92
    %v337 = vmul.f32 %v336, 0.6931472
    %v338 = vlog2.pop %v93
    %v339 = vmul.f32 %v338, 0.6931472
    %v340 = vlog2.pop %v94
    %v341 = vmul.f32 %v340, 0.6931472
    %v342 = vlog2.pop %v95
    %v343 = vmul.f32 %v342, 0.6931472
    %v344 = vlog2.pop %v96
    %v345 = vmul.f32 %v344, 0.6931472
    %v346 = vlog2.pop %v97
    %v347 = vmul.f32 %v346, 0.6931472
    %v348 = vstv %s12
    %v349 = vmul.f32 %v348, %v285
    %v350 = vmul.f32 %v348, %v287
    %v351 = vmul.f32 %v348, %v289
    %v352 = vmul.f32 %v348, %v291
    %v353 = vmul.f32 %v348, %v293
    %v354 = vmul.f32 %v348, %v295
    %v355 = vmul.f32 %v348, %v297
    %v356 = vmul.f32 %v348, %v299
    %v357 = vmul.f32 %v348, %v301
    %v358 = vmul.f32 %v348, %v303
    %v359 = vmul.f32 %v348, %v305
    %v360 = vmul.f32 %v348, %v307
    %v361 = vmul.f32 %v348, %v309
    %v362 = vmul.f32 %v348, %v311
    %v363 = vmul.f32 %v348, %v313
    %v364 = vmul.f32 %v348, %v315
    %v365 = vmul.f32 %v348, %v317
    %v366 = vmul.f32 %v348, %v319
    %v367 = vmul.f32 %v348, %v321
    %v368 = vmul.f32 %v348, %v323
    %v369 = vmul.f32 %v348, %v325
    %v370 = vmul.f32 %v348, %v327
    %v371 = vmul.f32 %v348, %v329
    %v372 = vmul.f32 %v348, %v331
    %v373 = vmul.f32 %v348, %v333
    %v374 = vmul.f32 %v348, %v335
    %v375 = vmul.f32 %v348, %v337
    %v376 = vmul.f32 %v348, %v339
    %v377 = vmul.f32 %v348, %v341
    %v378 = vmul.f32 %v348, %v343
    %v379 = vmul.f32 %v348, %v345
    %v380 = vmul.f32 %v348, %v347
    %v381 = vmul.f32 %v349, 1.442695
    %v382 = vpow.pop %v381
    %v383 = vmul.f32 %v350, 1.442695
    %v384 = vpow.pop %v383
    %v385 = vmul.f32 %v351, 1.442695
    %v386 = vpow.pop %v385
    %v387 = vmul.f32 %v352, 1.442695
    %v388 = vpow.pop %v387
    %v389 = vmul.f32 %v353, 1.442695
    %v390 = vpow.pop %v389
    %v391 = vmul.f32 %v354, 1.442695
    %v392 = vpow.pop %v391
    %v393 = vmul.f32 %v355, 1.442695
    %v394 = vpow.pop %v393
    %v395 = vmul.f32 %v356, 1.442695
    %v396 = vpow.pop %v395
    %v397 = vmul.f32 %v357, 1.442695
    %v398 = vpow.pop %v397
    %v399 = vmul.f32 %v358, 1.442695
    %v400 = vpow.pop %v399
    %v401 = vmul.f32 %v359, 1.442695
    %v402 = vpow.pop %v401
    %v403 = vmul.f32 %v360, 1.442695
    %v404 = vpow.pop %v403
    %v405 = vmul.f32 %v361, 1.442695
    %v406 = vpow.pop %v405
    %v407 = vmul.f32 %v362, 1.442695
    %v408 = vpow.pop %v407
    %v409 = vmul.f32 %v363, 1.442695
    %v410 = vpow.pop %v409
    %v411 = vmul.f32 %v364, 1.442695
    %v412 = vpow.pop %v411
    %v413 = vmul.f32 %v365, 1.442695
    %v414 = vpow.pop %v413
    %v415 = vmul.f32 %v366, 1.442695
    %v416 = vpow.pop %v415
    %v417 = vmul.f32 %v367, 1.442695
    %v418 = vpow.pop %v417
    %v419 = vmul.f32 %v368, 1.442695
    %v420 = vpow.pop %v419
    %v421 = vmul.f32 %v369, 1.442695
    %v422 = vpow.pop %v421
    %v423 = vmul.f32 %v370, 1.442695
    %v424 = vpow.pop %v423
    %v425 = vmul.f32 %v371, 1.442695
    %v426 = vpow.pop %v425
    %v427 = vmul.f32 %v372, 1.442695
    %v428 = vpow.pop %v427
    %v429 = vmul.f32 %v373, 1.442695
    %v430 = vpow.pop %v429
    %v431 = vmul.f32 %v374, 1.442695
    %v432 = vpow.pop %v431
    %v433 = vmul.f32 %v375, 1.442695
    %v434 = vpow.pop %v433
    %v435 = vmul.f32 %v376, 1.442695
    %v436 = vpow.pop %v435
    %v437 = vmul.f32 %v377, 1.442695
    %v438 = vpow.pop %v437
    %v439 = vmul.f32 %v378, 1.442695
    %v440 = vpow.pop %v439
    %v441 = vmul.f32 %v379, 1.442695
    %v442 = vpow.pop %v441
    %v443 = vmul.f32 %v380, 1.442695
    %v444 = vpow.pop %v443
    %v445 = vadd.f32 %v382, %v384
    %446 = vadd.xlane.f32.xlu0 %v445
    %v447 = vpop.xlane.xlu0 %446
    %v448 = vadd.f32 %v386, %v388
    %449 = vadd.xlane.f32.xlu0 %v448
    %v450 = vpop.xlane.xlu0 %449
    %v451 = vadd.f32 %v390, %v392
    %452 = vadd.xlane.f32.xlu0 %v451
    %v453 = vpop.xlane.xlu0 %452
    %v454 = vadd.f32 %v394, %v396
    %455 = vadd.xlane.f32.xlu0 %v454
    %v456 = vpop.xlane.xlu0 %455
    %v457 = vadd.f32 %v398, %v400
    %458 = vadd.xlane.f32.xlu0 %v457
    %v459 = vpop.xlane.xlu0 %458
    %v460 = vadd.f32 %v402, %v404
    %461 = vadd.xlane.f32.xlu0 %v460
    %v462 = vpop.xlane.xlu0 %461
    %v463 = vadd.f32 %v406, %v408
    %464 = vadd.xlane.f32.xlu0 %v463
    %v465 = vpop.xlane.xlu0 %464
    %v466 = vadd.f32 %v410, %v412
    %467 = vadd.xlane.f32.xlu0 %v466
    %v468 = vpop.xlane.xlu0 %467
    %v469 = vadd.f32 %v414, %v416
    %470 = vadd.xlane.f32.xlu0 %v469
    %v471 = vpop.xlane.xlu0 %470
    %v472 = vadd.f32 %v418, %v420
    %473 = vadd.xlane.f32.xlu0 %v472
    %v474 = vpop.xlane.xlu0 %473
    %v475 = vadd.f32 %v422, %v424
    %476 = vadd.xlane.f32.xlu0 %v475
    %v477 = vpop.xlane.xlu0 %476
    %v478 = vadd.f32 %v426, %v428
    %479 = vadd.xlane.f32.xlu0 %v478
    %v480 = vpop.xlane.xlu0 %479
    %v481 = vadd.f32 %v430, %v432
    %482 = vadd.xlane.f32.xlu0 %v481
    %v483 = vpop.xlane.xlu0 %482
    %v484 = vadd.f32 %v434, %v436
    %485 = vadd.xlane.f32.xlu0 %v484
    %v486 = vpop.xlane.xlu0 %485
    %v487 = vadd.f32 %v438, %v440
    %488 = vadd.xlane.f32.xlu0 %v487
    %v489 = vpop.xlane.xlu0 %488
    %v490 = vadd.f32 %v442, %v444
    %491 = vadd.xlane.f32.xlu0 %v490
    %v492 = vpop.xlane.xlu0 %491
    %v493 = vadd.f32 %v268, %v447
    %v494 = vadd.f32 %v269, %v450
    %v495 = vadd.f32 %v270, %v453
    %v496 = vadd.f32 %v271, %v456
    %v497 = vadd.f32 %v272, %v459
    %v498 = vadd.f32 %v273, %v462
    %v499 = vadd.f32 %v274, %v465
    %v500 = vadd.f32 %v275, %v468
    %v501 = vadd.f32 %v276, %v471
    %v502 = vadd.f32 %v277, %v474
    %v503 = vadd.f32 %v278, %v477
    %v504 = vadd.f32 %v279, %v480
    %v505 = vadd.f32 %v280, %v483
    %v506 = vadd.f32 %v281, %v486
    %v507 = vadd.f32 %v282, %v489
    %v508 = vadd.f32 %v283, %v492
    %vm509 = vcmask 7168
    %510 = vst.msk [vmem:[#allocation2] sm:$0xff] %vm509, %v493
    %511 = vst.msk [vmem:[#allocation2 + $0x8] sm:$0xff] %vm509, %v494
    %512 = vst.msk [vmem:[#allocation2 + $0x10] sm:$0xff] %vm509, %v495
    %513 = vst.msk [vmem:[#allocation2 + $0x18] sm:$0xff] %vm509, %v496
    %514 = vst.msk [vmem:[#allocation2 + $0x20] sm:$0xff] %vm509, %v497
    %515 = vst.msk [vmem:[#allocation2 + $0x28] sm:$0xff] %vm509, %v498
    %516 = vst.msk [vmem:[#allocation2 + $0x30] sm:$0xff] %vm509, %v499
    %517 = vst.msk [vmem:[#allocation2 + $0x38] sm:$0xff] %vm509, %v500
    %518 = vst.msk [vmem:[#allocation2 + $0x40] sm:$0xff] %vm509, %v501
    %519 = vst.msk [vmem:[#allocation2 + $0x48] sm:$0xff] %vm509, %v502
    %520 = vst.msk [vmem:[#allocation2 + $0x50] sm:$0xff] %vm509, %v503
    %521 = vst.msk [vmem:[#allocation2 + $0x58] sm:$0xff] %vm509, %v504
    %522 = vst.msk [vmem:[#allocation2 + $0x60] sm:$0xff] %vm509, %v505
    %523 = vst.msk [vmem:[#allocation2 + $0x68] sm:$0xff] %vm509, %v506
    %524 = vst.msk [vmem:[#allocation2 + $0x70] sm:$0xff] %vm509, %v507
    %525 = vst.msk [vmem:[#allocation2 + $0x78] sm:$0xff] %vm509, %v508
  $region21: #{gem_forward.1} parent=0 // pred_fallthru
    _
  // Predicated region
  $region22: #{gem_forward.1} parent=0 // pred_check
    %p526 = pneg %p13
  $region23: #{gem_forward.1} parent=0 // pred_check_branch
    %528 = sbr.rel (%p526) target = $region25
  $region24: #{gem_forward.1} parent=0 // pred_region
    %v529 = vld [vmem:[#allocation2] sm:$0xff]
    %v530 = vld [vmem:[#allocation2 + $0x8] sm:$0xff]
    %v531 = vld [vmem:[#allocation2 + $0x10] sm:$0xff]
    %v532 = vld [vmem:[#allocation2 + $0x18] sm:$0xff]
    %v533 = vld [vmem:[#allocation2 + $0x20] sm:$0xff]
    %v534 = vld [vmem:[#allocation2 + $0x28] sm:$0xff]
    %v535 = vld [vmem:[#allocation2 + $0x30] sm:$0xff]
    %v536 = vld [vmem:[#allocation2 + $0x38] sm:$0xff]
    %v537 = vld [vmem:[#allocation2 + $0x40] sm:$0xff]
    %v538 = vld [vmem:[#allocation2 + $0x48] sm:$0xff]
    %v539 = vld [vmem:[#allocation2 + $0x50] sm:$0xff]
    %v540 = vld [vmem:[#allocation2 + $0x58] sm:$0xff]
    %v541 = vld [vmem:[#allocation2 + $0x60] sm:$0xff]
    %v542 = vld [vmem:[#allocation2 + $0x68] sm:$0xff]
    %v543 = vld [vmem:[#allocation2 + $0x70] sm:$0xff]
    %v544 = vld [vmem:[#allocation2 + $0x78] sm:$0xff]
    %v545 = vmul.f32 %v529, 0.00390625
    %v546 = vmul.f32 %v530, 0.00390625
    %v547 = vmul.f32 %v531, 0.00390625
    %v548 = vmul.f32 %v532, 0.00390625
    %v549 = vmul.f32 %v533, 0.00390625
    %v550 = vmul.f32 %v534, 0.00390625
    %v551 = vmul.f32 %v535, 0.00390625
    %v552 = vmul.f32 %v536, 0.00390625
    %v553 = vmul.f32 %v537, 0.00390625
    %v554 = vmul.f32 %v538, 0.00390625
    %v555 = vmul.f32 %v539, 0.00390625
    %v556 = vmul.f32 %v540, 0.00390625
    %v557 = vmul.f32 %v541, 0.00390625
    %v558 = vmul.f32 %v542, 0.00390625
    %v559 = vmul.f32 %v543, 0.00390625
    %v560 = vmul.f32 %v544, 0.00390625
    %v561 = vlog2.pop %v545
    %v562 = vmul.f32 %v561, 0.6931472
    %v563 = vlog2.pop %v546
    %v564 = vmul.f32 %v563, 0.6931472
    %v565 = vlog2.pop %v547
    %v566 = vmul.f32 %v565, 0.6931472
    %v567 = vlog2.pop %v548
    %v568 = vmul.f32 %v567, 0.6931472
    %v569 = vlog2.pop %v549
    %v570 = vmul.f32 %v569, 0.6931472
    %v571 = vlog2.pop %v550
    %v572 = vmul.f32 %v571, 0.6931472
    %v573 = vlog2.pop %v551
    %v574 = vmul.f32 %v573, 0.6931472
    %v575 = vlog2.pop %v552
    %v576 = vmul.f32 %v575, 0.6931472
    %v577 = vlog2.pop %v553
    %v578 = vmul.f32 %v577, 0.6931472
    %v579 = vlog2.pop %v554
    %v580 = vmul.f32 %v579, 0.6931472
    %v581 = vlog2.pop %v555
    %v582 = vmul.f32 %v581, 0.6931472
    %v583 = vlog2.pop %v556
    %v584 = vmul.f32 %v583, 0.6931472
    %v585 = vlog2.pop %v557
    %v586 = vmul.f32 %v585, 0.6931472
    %v587 = vlog2.pop %v558
    %v588 = vmul.f32 %v587, 0.6931472
    %v589 = vlog2.pop %v559
    %v590 = vmul.f32 %v589, 0.6931472
    %v591 = vlog2.pop %v560
    %v592 = vmul.f32 %v591, 0.6931472
    %v593 = vstv %s12
    %v594 = vrcp.pop %v593
    %s595 = vtos %v594
    %v596 = vstv %s595
    %v597 = vmul.f32 %v562, %v596
    %v598 = vmul.f32 %v564, %v596
    %v599 = vmul.f32 %v566, %v596
    %v600 = vmul.f32 %v568, %v596
    %v601 = vmul.f32 %v570, %v596
    %v602 = vmul.f32 %v572, %v596
    %v603 = vmul.f32 %v574, %v596
    %v604 = vmul.f32 %v576, %v596
    %v605 = vmul.f32 %v578, %v596
    %v606 = vmul.f32 %v580, %v596
    %v607 = vmul.f32 %v582, %v596
    %v608 = vmul.f32 %v584, %v596
    %v609 = vmul.f32 %v586, %v596
    %v610 = vmul.f32 %v588, %v596
    %v611 = vmul.f32 %v590, %v596
    %v612 = vmul.f32 %v592, %v596
    %v613 = vmul.f32 %v597, 1.442695
    %v614 = vpow.pop %v613
    %v615 = vmul.f32 %v598, 1.442695
    %v616 = vpow.pop %v615
    %v617 = vmul.f32 %v599, 1.442695
    %v618 = vpow.pop %v617
    %v619 = vmul.f32 %v600, 1.442695
    %v620 = vpow.pop %v619
    %v621 = vmul.f32 %v601, 1.442695
    %v622 = vpow.pop %v621
    %v623 = vmul.f32 %v602, 1.442695
    %v624 = vpow.pop %v623
    %v625 = vmul.f32 %v603, 1.442695
    %v626 = vpow.pop %v625
    %v627 = vmul.f32 %v604, 1.442695
    %v628 = vpow.pop %v627
    %v629 = vmul.f32 %v605, 1.442695
    %v630 = vpow.pop %v629
    %v631 = vmul.f32 %v606, 1.442695
    %v632 = vpow.pop %v631
    %v633 = vmul.f32 %v607, 1.442695
    %v634 = vpow.pop %v633
    %v635 = vmul.f32 %v608, 1.442695
    %v636 = vpow.pop %v635
    %v637 = vmul.f32 %v609, 1.442695
    %v638 = vpow.pop %v637
    %v639 = vmul.f32 %v610, 1.442695
    %v640 = vpow.pop %v639
    %v641 = vmul.f32 %v611, 1.442695
    %v642 = vpow.pop %v641
    %v643 = vmul.f32 %v612, 1.442695
    %v644 = vpow.pop %v643
    %vm645 = vcmask 7168
    %646 = vst.msk [vmem:[%s2] sm:$0xff] %vm645, %v614
    %647 = vst.msk [vmem:[%s2 + $0x8] sm:$0xff] %vm645, %v616
    %648 = vst.msk [vmem:[%s2 + $0x10] sm:$0xff] %vm645, %v618
    %649 = vst.msk [vmem:[%s2 + $0x18] sm:$0xff] %vm645, %v620
    %650 = vst.msk [vmem:[%s2 + $0x20] sm:$0xff] %vm645, %v622
    %651 = vst.msk [vmem:[%s2 + $0x28] sm:$0xff] %vm645, %v624
    %652 = vst.msk [vmem:[%s2 + $0x30] sm:$0xff] %vm645, %v626
    %653 = vst.msk [vmem:[%s2 + $0x38] sm:$0xff] %vm645, %v628
    %654 = vst.msk [vmem:[%s2 + $0x40] sm:$0xff] %vm645, %v630
    %655 = vst.msk [vmem:[%s2 + $0x48] sm:$0xff] %vm645, %v632
    %656 = vst.msk [vmem:[%s2 + $0x50] sm:$0xff] %vm645, %v634
    %657 = vst.msk [vmem:[%s2 + $0x58] sm:$0xff] %vm645, %v636
    %658 = vst.msk [vmem:[%s2 + $0x60] sm:$0xff] %vm645, %v638
    %659 = vst.msk [vmem:[%s2 + $0x68] sm:$0xff] %vm645, %v640
    %660 = vst.msk [vmem:[%s2 + $0x70] sm:$0xff] %vm645, %v642
    %661 = vst.msk [vmem:[%s2 + $0x78] sm:$0xff] %vm645, %v644
  $region25: #{gem_forward.1} parent=0 // pred_fallthru
    _
  // Predicated region
  $region26: #{gem_forward.1} parent=0 // pred_check
    _
  $region27: #{gem_forward.1} parent=0 // pred_check_branch
    %663 = sbr.rel (0) target = $region29
  $region28: #{gem_forward.1} parent=0 // pred_region
    _
  $region29: #{gem_forward.1} parent=0 // pred_fallthru
    _
  // Predicated region
  $region30: #{gem_forward.1} parent=0 // pred_check
    _
  $region31: #{gem_forward.1} parent=0 // pred_check_branch
    %665 = sbr.rel (0) target = $region33
  $region32: #{gem_forward.1} parent=0 // pred_region
    _
  $region33: #{gem_forward.1} parent=0 // pred_fallthru
    _

</llo_original>
